<compile_context>
chip_gen: v7x
topology: tpu7x:2x2x1
jax: 0.10.0
libtpu: 0.0.40
codegen_flags: <defaults>
</compile_context>

<pallas_src>
import functools
import math

import jax
import jax.numpy as jnp
from jax.experimental import pallas as pl
from jax.experimental.pallas import tpu as pltpu

_LANE = 128
_MAX_DMA_CHUNKS = 8          # small number of concurrent DMA descriptors
_MIN_CHUNK_BYTES = 4 << 20   # don't split copies smaller than ~4 MiB


def _resolve_view_shape(total: int, shape) -> tuple:
    """Resolve a torch-style view shape (may contain a single -1)."""
    shape = tuple(int(s) for s in shape)
    if shape.count(-1) > 1:
        raise ValueError("only one -1 allowed in view shape")
    if -1 in shape:
        known = 1
        for s in shape:
            if s != -1:
                known *= s
        if known == 0 or total % known != 0:
            raise ValueError(f"cannot view {total} elements as {shape}")
        shape = tuple(total // known if s == -1 else s for s in shape)
    if math.prod(shape) != total:
        raise ValueError(f"view shape {shape} incompatible with {total} elements")
    return shape


def _pick_lanes(total: int, max_lanes: int):
    """Widest 128-multiple divisor of `total` (or None if not 128-divisible)."""
    if total % _LANE != 0:
        return None
    for k in range(max(1, max_lanes // _LANE), 0, -1):
        c = k * _LANE
        if total % c == 0:
            return c
    return None


def _plan_chunks(rows: int, row_bytes: int, max_chunks: int, min_chunk_bytes: int):
    """Split `rows` leading-axis rows into <= max_chunks contiguous spans."""
    by_size = max(1, (rows * row_bytes) // max(1, min_chunk_bytes))
    n = max(1, min(max_chunks, rows, by_size))
    base, rem = divmod(rows, n)
    chunks, start = [], 0
    for i in range(n):
        size = base + (1 if i < rem else 0)
        if size:
            chunks.append((start, size))
            start += size
    return chunks


def _hbm_memcpy_kernel(x_hbm, o_hbm, sems, *, chunks):
    # Pure HBM -> HBM DMA: no VMEM staging, no vector-unit copy.  All chunk
    # copies are issued back-to-back (each on its own semaphore) so several
    # DMA engines stream concurrently; then wait for all of them.
    n_rows = x_hbm.shape[0]
    copies = []
    for idx, (start, size) in enumerate(chunks):
        if start == 0 and size == n_rows:
            src, dst = x_hbm, o_hbm            # whole-array copy, no slicing
        else:
            src = x_hbm.at[pl.ds(start, size)]
            dst = o_hbm.at[pl.ds(start, size)]
        cp = pltpu.make_async_copy(src, dst, sems.at[idx])
        cp.start()
        copies.append(cp)
    for cp in copies:
        cp.wait()


def pallas_view(
    x: jax.Array,
    shape,
    *,
    materialize: bool = False,
    max_lanes: int = 4096,
    max_dma_chunks: int = _MAX_DMA_CHUNKS,
    min_chunk_bytes: int = _MIN_CHUNK_BYTES,
) -> jax.Array:
    """Equivalent of torch `x.view(*shape)`.

    Default: metadata-only reshape (zero HBM traffic), matching `.view`
    semantics.  With `materialize=True`, the result is written to a fresh
    buffer via a chunked HBM->HBM DMA Pallas kernel.
    """
    total = int(x.size)
    out_shape = _resolve_view_shape(total, shape)

    # Fast (and semantically exact) path: a contiguous view is metadata-only.
    if not materialize or total == 0:
        return x.reshape(out_shape)

    itemsize = jnp.dtype(x.dtype).itemsize
    flat = x.reshape(-1)  # metadata-only

    lanes = _pick_lanes(total, max_lanes)
    if lanes is not None:
        rows = total // lanes
        slab = flat.reshape(rows, lanes)       # metadata-only
        row_bytes = lanes * itemsize
    else:
        # Not 128-divisible: one whole-array 1D DMA (no padding, no slicing).
        rows = total
        slab = flat
        row_bytes = itemsize
        max_dma_chunks = 1

    chunks = _plan_chunks(rows, row_bytes, max_dma_chunks, min_chunk_bytes)

    copied = pl.pallas_call(
        functools.partial(_hbm_memcpy_kernel, chunks=chunks),
        out_shape=jax.ShapeDtypeStruct(slab.shape, slab.dtype),
        in_specs=[pl.BlockSpec(memory_space=pl.ANY)],
        out_specs=pl.BlockSpec(memory_space=pl.ANY),
        scratch_shapes=[pltpu.SemaphoreType.DMA((len(chunks),))],
        cost_estimate=pl.CostEstimate(
            flops=0,
            transcendentals=0,
            bytes_accessed=2 * total * itemsize,
        ),
    )(slab)

    return copied.reshape(out_shape)


class View:
    """JAX/Pallas equivalent of the PyTorch `View` nn.Module."""

    def __init__(self, shape):
        self.shape = tuple(shape)

    def __call__(self, x, *, materialize: bool = False):
        return pallas_view(x, self.shape, materialize=materialize)


if __name__ == "__main__":
    key = jax.random.PRNGKey(0)
    k0, k1, k2 = jax.random.split(key, 3)

    # 1) Default path (matches torch .view): metadata-only reshape, no kernel.
    x = jax.random.normal(k0, (2, 4, 16, 16), dtype=jnp.float32)
    view = View((-1, 4 * 16 * 16))
    y = jax.block_until_ready(view(x))
    assert y.shape == (2, 1024) and y.dtype == x.dtype
    assert bool(jnp.all(y == x.reshape(2, 1024)))

    # 2) Opt-in materialized copy: runs the HBM->HBM DMA Pallas kernel.
    y_copy = jax.block_until_ready(view(x, materialize=True))
    assert y_copy.shape == (2, 1024)
    assert bool(jnp.all(y_copy == x.reshape(2, 1024)))

    # 3) Element count not divisible by 128 -> single whole-array DMA path
    #    (no padding, no trailing slice).
    x2 = jax.random.normal(k1, (2, 3, 5, 7), dtype=jnp.float32)
    y2 = jax.block_until_ready(pallas_view(x2, (6, 35), materialize=True))
    assert y2.shape == (6, 35)
    assert bool(jnp.all(y2 == x2.reshape(6, 35)))

    # 4) bf16 tensor with a small chunk target -> multi-chunk concurrent DMAs.
    x3 = jax.random.normal(k2, (8, 16, 32, 32), dtype=jnp.bfloat16)
    y3 = jax.block_until_ready(
        pallas_view(
            x3,
            (8, -1),
            materialize=True,
            max_lanes=1024,
            min_chunk_bytes=32 * 1024,
        )
    )
    assert y3.shape == (8, 16 * 32 * 32)
    assert bool(jnp.all(y3 == x3.reshape(8, 16 * 32 * 32)))

    print("KERNEL_OK")
</pallas_src>

<mosaic_0001>
module attributes {stable_mosaic.version = 11 : i64} {
  func.func @_hbm_memcpy_kernel(%arg0: memref<1x2048xf32, #tpu.memory_space<any>>, %arg1: memref<1x2048xf32, #tpu.memory_space<any>>, %arg2: memref<1x!tpu.dma_semaphore, #tpu.memory_space<semaphore_mem>>) attributes {dimension_semantics = [], scalar_prefetch = 0 : i64, scratch_operands = 1 : i64, tpu.core_type = #tpu.core_type<tc>} {
    %c0_i32 = arith.constant 0 : i32
    %0 = tpu.memref_slice %arg2[%c0_i32] : memref<1x!tpu.dma_semaphore, #tpu.memory_space<semaphore_mem>> -> memref<1x!tpu.dma_semaphore, #tpu.memory_space<semaphore_mem>>
    %1 = tpu.memref_squeeze %0 : memref<1x!tpu.dma_semaphore, #tpu.memory_space<semaphore_mem>> -> memref<!tpu.dma_semaphore, #tpu.memory_space<semaphore_mem>>
    tpu.enqueue_dma source(%arg0 : memref<1x2048xf32, #tpu.memory_space<any>>) target(%arg1 : memref<1x2048xf32, #tpu.memory_space<any>>) target_semaphore(%1 : memref<!tpu.dma_semaphore, #tpu.memory_space<semaphore_mem>>)
    %c0_i32_0 = arith.constant 0 : i32
    %2 = tpu.memref_slice %arg2[%c0_i32_0] : memref<1x!tpu.dma_semaphore, #tpu.memory_space<semaphore_mem>> -> memref<1x!tpu.dma_semaphore, #tpu.memory_space<semaphore_mem>>
    %3 = tpu.memref_squeeze %2 : memref<1x!tpu.dma_semaphore, #tpu.memory_space<semaphore_mem>> -> memref<!tpu.dma_semaphore, #tpu.memory_space<semaphore_mem>>
    tpu.wait_dma2 semaphore(%3 : memref<!tpu.dma_semaphore, #tpu.memory_space<semaphore_mem>>) src(%arg0 : memref<1x2048xf32, #tpu.memory_space<any>>) dst(%arg1 : memref<1x2048xf32, #tpu.memory_space<any>>)
    return
  }
}

</mosaic_0001>

<llo_original>
// kernel: tpu_custom_call.1
$region0: #{tpu_custom_call.1}
  #allocation0 [shape = 'u32[]', space=smem, size = 0x4, offset = 0x4, fixed_abs, tag = 'smem constant byte address 0x4 - core index']
  #allocation1 [shape = 'u32[144,128]{1,0:T(1,128)}', space=vmem, size = 0x12000, scoped, tag = 'internal scratch']
  #allocation2 [shape = 's32[1]{0}', space=sflag, size = 0x4, scoped, tag = 'scratch operand']
  #allocation3 [shape = 's32[]', space=sflag, size = 0x4, offset = 0, fixed_abs, tag = 'sflag constant byte address 0x0 - dummy sync flag']
  #allocation4 [shape = 'u32[0]{0}', space=smem, size = 0, offset = 0, fixed_abs, tag = 'smem constant byte address 0x0 - null']
  %s0 = inlined_call_operand.hbm [shape: f32[1,2048], index: 0, kind: input, shape index: {}]
  %s1 = inlined_call_operand.hbm [shape: f32[1,2048], index: 1, kind: output, shape index: {}]
  %s2 = sld [smem:[#allocation0]]
  $region2: #{tpu_custom_call.1} parent=0
    _
  %s4 = ssub.s32 1, %s2
  %s5 = scalar_select 0, %s4, %s2
  %s7 = sshll.u32 1, 14
  %s8 = sxor.u32 4294967295, %s7
  %s11 = sshll.u32 3, 24
  %s12 = sxor.u32 4294967295, %s11
  %s13 = sand.u32 0, %s12
  %s15 = sor.u32 %s13, 0
  %18 = dma.general %s0, 256, %s1, [#allocation2], [#allocation3], [#allocation4], %s15, 0
  %s19 = smul.u32 1, 16
  %s20 = sshll.u32 %s19, 4
  %21 = dma.done [#allocation2], %s20
  %22 = vsyncmov [#allocation2]
  %s23 = vpop.sfrf %22
  %p24 = scmp.eq.s32.totalorder %s23, 0
  %p25 = pneg %p24
  %27 = shalt.err (%p25)

</llo_original>
